<compile_context>
chip_gen: v7x
topology: tpu7x:2x2x1
jax: 0.10.0
libtpu: 0.0.40
codegen_flags: <defaults>
</compile_context>

<pallas_src>
import jax
import jax.numpy as jnp
from jax import lax
from jax.experimental import pallas as pl
from jax.experimental.pallas import tpu as pltpu

_EPS = 1e-9


def _charbonnier(d):
    # (d^2 + eps^2)^0.25 == rsqrt(rsqrt(d^2 + eps^2))  -> EUP path, no extra VPU muls.
    y = d * d + jnp.float32(_EPS * _EPS)
    return lax.rsqrt(lax.rsqrt(y))


def _smooth_loss_kernel(x_ref, halo_ref, out_ref, acc_ref):
    j = pl.program_id(1)
    n_j = pl.num_programs(1)

    @pl.when(j == 0)
    def _init():
        acc_ref[...] = jnp.zeros_like(acc_ref)

    x = x_ref[...].astype(jnp.float32)                # (TB, TH, W)
    tb, th, w = x.shape

    # Row directly below this tile (row 0 of the next h-tile); at the global
    # bottom it is the zero padding row.
    below = halo_ref[:, 0:1, :].astype(jnp.float32)   # (TB, 1, W)
    below = jnp.where(j == n_j - 1, jnp.zeros_like(below), below)

    # Vertical neighbour differences.
    if th > 1:
        acc_ref[:, 0:th - 1, :] += _charbonnier(x[:, 0:th - 1, :] - x[:, 1:th, :])
    acc_ref[:, th - 1:th, :] += _charbonnier(x[:, th - 1:th, :] - below)

    # Horizontal neighbour differences (last column pairs with zero padding).
    if w > 1:
        acc_ref[:, :, 0:w - 1] += _charbonnier(x[:, :, 0:w - 1] - x[:, :, 1:w])
    acc_ref[:, :, w - 1:w] += _charbonnier(x[:, :, w - 1:w])

    # One full cross-lane/sublane reduce per (b*c) block, on the last h-step only.
    @pl.when(j == n_j - 1)
    def _finalize():
        total = jnp.sum(acc_ref[...])
        out_ref[...] = jnp.broadcast_to(total, (1, 1, 1)).astype(out_ref.dtype)


def _pick_tb(bc):
    # Prefer >=2 blocks along the parallel axis (v7x has 2 TensorCores).
    for cand in (8, 4, 2, 1):
        if bc % cand == 0 and bc // cand >= 2:
            return cand
    return bc


def _pick_th(h, w, tb, budget_bytes=2 << 20):
    # Largest multiple-of-8 divisor of h that (a) leaves >=2 reduction steps and
    # (b) keeps one f32 tile under ~2 MiB, so the double-buffered pipeline fits
    # comfortably inside every generation's scoped VMEM (v5e 16 MiB default,
    # v7x 32 MiB).  Fallback: the full h extent as a single block.
    best = None
    for cand in (8, 16, 32, 64, 128, 256, 512):
        if cand < h and h % cand == 0 and tb * cand * w * 4 <= budget_bytes:
            best = cand
    return best if best is not None else h


def smooth_loss(flows):
    b, c, h, w = flows.shape
    bc = b * c
    x3 = flows.reshape(bc, h, w)        # free reshape; keep native dtype in HBM

    tb = _pick_tb(bc)
    th = _pick_th(h, w, tb)
    hh = 8 if th % 8 == 0 else th       # halo block height (BlockSpec-legal)
    n_bc = bc // tb
    n_h = h // th

    grid_spec = pltpu.PrefetchScalarGridSpec(
        num_scalar_prefetch=0,
        grid=(n_bc, n_h),
        in_specs=[
            # Main tile.
            pl.BlockSpec((tb, th, w), lambda i, j: (i, j, 0)),
            # Vertical halo: first rows of the *next* h-tile (clamped at the
            # bottom; the clamped value is zero-masked inside the kernel).
            pl.BlockSpec(
                (tb, hh, w),
                lambda i, j: (i, jnp.minimum((j + 1) * (th // hh), h // hh - 1), 0),
            ),
        ],
        out_specs=pl.BlockSpec((1, 1, 1), lambda i, j: (i, 0, 0)),
        scratch_shapes=[pltpu.VMEM((tb, th, w), jnp.float32)],
    )

    partials = pl.pallas_call(
        _smooth_loss_kernel,
        out_shape=jax.ShapeDtypeStruct((n_bc, 1, 1), jnp.float32),
        grid_spec=grid_spec,
        compiler_params=pltpu.CompilerParams(
            dimension_semantics=("parallel", "arbitrary"),
            vmem_limit_bytes=32 * 1024 * 1024,
        ),
    )(x3, x3)

    # Tiny host-side finish: sum the per-block partials and apply the 1/(2*b*h*w) scale.
    return jnp.sum(partials) * jnp.float32(1.0 / (2.0 * b * h * w))


def smooth_loss_ref(flows):
    # Pure-JAX reference mirroring the PyTorch forward.
    flows = flows.astype(jnp.float32)
    b, c, h, w = flows.shape
    v_tr = jnp.concatenate([flows[:, :, 1:, :], jnp.zeros((b, c, 1, w), jnp.float32)], axis=2)
    h_tr = jnp.concatenate([flows[:, :, :, 1:], jnp.zeros((b, c, h, 1), jnp.float32)], axis=3)
    ch = lambda d: jnp.power(d * d + jnp.float32(_EPS) ** 2, 0.25)
    err = ch(flows - v_tr) + ch(flows - h_tr)
    err = jnp.sum(err, axis=1) / 2.0
    return jnp.mean(err)


if __name__ == "__main__":
    key = jax.random.PRNGKey(0)
    b, c, h, w = 2, 4, 16, 16          # optical-flow style input
    flows = jax.random.normal(key, (b, c, h, w), dtype=jnp.float32)

    loss = smooth_loss(flows)
    jax.block_until_ready(loss)

    ref = smooth_loss_ref(flows)
    assert jnp.allclose(loss, ref, rtol=1e-3, atol=1e-6), (loss, ref)

    print("KERNEL_OK")
</pallas_src>

<mosaic_0001>
module attributes {stable_mosaic.version = 11 : i64} {
  func.func @_smooth_loss_kernel(%arg0: i32, %arg1: i32, %arg2: memref<4x8x16xf32, #tpu.memory_space<vmem>>, %arg3: memref<4x8x16xf32, #tpu.memory_space<vmem>>, %arg4: memref<1x1x1xf32, #tpu.memory_space<vmem>>, %arg5: memref<4x8x16xf32, #tpu.memory_space<vmem>>) attributes {dimension_semantics = [#tpu.dimension_semantics<parallel>, #tpu.dimension_semantics<arbitrary>], iteration_bounds = array<i64: 2, 2>, scalar_prefetch = 0 : i64, scratch_operands = 1 : i64, tpu.core_type = #tpu.core_type<tc>, window_params = [{transform_indices = @transform_0, window_bounds = array<i64: 4, 8, 16>}, {transform_indices = @transform_1, window_bounds = array<i64: 4, 8, 16>}, {transform_indices = @transform_2, window_bounds = array<i64: 1, 1, 1>}]} {
    %c0_i32 = arith.constant 0 : i32
    %0 = arith.cmpi eq, %arg1, %c0_i32 : i32
    %1 = arith.extui %0 : i1 to i32
    %c0_i32_0 = arith.constant 0 : i32
    %2 = arith.cmpi ne, %1, %c0_i32_0 : i32
    scf.if %2 {
      %cst_34 = arith.constant 0.000000e+00 : f32
      %52 = vector.broadcast %cst_34 : f32 to vector<4x8x16xf32>
      %c0_35 = arith.constant 0 : index
      %c0_36 = arith.constant 0 : index
      %c0_37 = arith.constant 0 : index
      %53 = vector.load %arg5[%c0_35, %c0_36, %c0_37] : memref<4x8x16xf32, #tpu.memory_space<vmem>>, vector<4x8x16xf32>
      tpu.vector_store %arg5[%c0_35, %c0_36, %c0_37], %52 {strides = array<i32>} : memref<4x8x16xf32, #tpu.memory_space<vmem>>, vector<4x8x16xf32>,
    } else {
    }
    %c0 = arith.constant 0 : index
    %c0_1 = arith.constant 0 : index
    %c0_2 = arith.constant 0 : index
    %3 = vector.load %arg2[%c0, %c0_1, %c0_2] : memref<4x8x16xf32, #tpu.memory_space<vmem>>, vector<4x8x16xf32>
    %c0_3 = arith.constant 0 : index
    %c0_4 = arith.constant 0 : index
    %c0_5 = arith.constant 0 : index
    %4 = vector.load %arg3[%c0_3, %c0_4, %c0_5] : memref<4x8x16xf32, #tpu.memory_space<vmem>>, vector<4x1x16xf32>
    %c1_i32 = arith.constant 1 : i32
    %5 = arith.cmpi eq, %arg1, %c1_i32 : i32
    %cst = arith.constant 0.000000e+00 : f32
    %6 = vector.broadcast %cst : f32 to vector<4x1x16xf32>
    %7 = arith.select %5, %6, %4 : vector<4x1x16xf32>
    %c0_6 = arith.constant 0 : index
    %c0_7 = arith.constant 0 : index
    %c0_8 = arith.constant 0 : index
    %8 = vector.load %arg5[%c0_6, %c0_7, %c0_8] : memref<4x8x16xf32, #tpu.memory_space<vmem>>, vector<4x7x16xf32>
    %9 = vector.extract_strided_slice %3 {offsets = [0, 0, 0], sizes = [4, 7, 16], strides = [1, 1, 1]} : vector<4x8x16xf32> to vector<4x7x16xf32>
    %10 = vector.extract_strided_slice %3 {offsets = [0, 1, 0], sizes = [4, 7, 16], strides = [1, 1, 1]} : vector<4x8x16xf32> to vector<4x7x16xf32>
    %11 = arith.subf %9, %10 : vector<4x7x16xf32>
    %12 = arith.mulf %11, %11 : vector<4x7x16xf32>
    %cst_9 = arith.constant 1.000000e-18 : f32
    %13 = vector.broadcast %cst_9 : f32 to vector<4x7x16xf32>
    %14 = arith.addf %12, %13 : vector<4x7x16xf32>
    %15 = math.rsqrt %14 : vector<4x7x16xf32>
    %16 = math.rsqrt %15 : vector<4x7x16xf32>
    %17 = arith.addf %8, %16 : vector<4x7x16xf32>
    %c0_10 = arith.constant 0 : index
    %c0_11 = arith.constant 0 : index
    %c0_12 = arith.constant 0 : index
    %18 = vector.load %arg5[%c0_10, %c0_11, %c0_12] : memref<4x8x16xf32, #tpu.memory_space<vmem>>, vector<4x7x16xf32>
    tpu.vector_store %arg5[%c0_10, %c0_11, %c0_12], %17 {strides = array<i32>} : memref<4x8x16xf32, #tpu.memory_space<vmem>>, vector<4x7x16xf32>,
    %c0_13 = arith.constant 0 : index
    %c7 = arith.constant 7 : index
    %c0_14 = arith.constant 0 : index
    %19 = vector.load %arg5[%c0_13, %c7, %c0_14] : memref<4x8x16xf32, #tpu.memory_space<vmem>>, vector<4x1x16xf32>
    %20 = vector.extract_strided_slice %3 {offsets = [0, 7, 0], sizes = [4, 1, 16], strides = [1, 1, 1]} : vector<4x8x16xf32> to vector<4x1x16xf32>
    %21 = arith.subf %20, %7 : vector<4x1x16xf32>
    %22 = arith.mulf %21, %21 : vector<4x1x16xf32>
    %cst_15 = arith.constant 1.000000e-18 : f32
    %23 = vector.broadcast %cst_15 : f32 to vector<4x1x16xf32>
    %24 = arith.addf %22, %23 : vector<4x1x16xf32>
    %25 = math.rsqrt %24 : vector<4x1x16xf32>
    %26 = math.rsqrt %25 : vector<4x1x16xf32>
    %27 = arith.addf %19, %26 : vector<4x1x16xf32>
    %c0_16 = arith.constant 0 : index
    %c7_17 = arith.constant 7 : index
    %c0_18 = arith.constant 0 : index
    %28 = vector.load %arg5[%c0_16, %c7_17, %c0_18] : memref<4x8x16xf32, #tpu.memory_space<vmem>>, vector<4x1x16xf32>
    tpu.vector_store %arg5[%c0_16, %c7_17, %c0_18], %27 {strides = array<i32>} : memref<4x8x16xf32, #tpu.memory_space<vmem>>, vector<4x1x16xf32>,
    %c0_19 = arith.constant 0 : index
    %c0_20 = arith.constant 0 : index
    %c0_21 = arith.constant 0 : index
    %29 = vector.load %arg5[%c0_19, %c0_20, %c0_21] : memref<4x8x16xf32, #tpu.memory_space<vmem>>, vector<4x8x15xf32>
    %30 = vector.extract_strided_slice %3 {offsets = [0, 0, 0], sizes = [4, 8, 15], strides = [1, 1, 1]} : vector<4x8x16xf32> to vector<4x8x15xf32>
    %31 = vector.extract_strided_slice %3 {offsets = [0, 0, 1], sizes = [4, 8, 15], strides = [1, 1, 1]} : vector<4x8x16xf32> to vector<4x8x15xf32>
    %32 = arith.subf %30, %31 : vector<4x8x15xf32>
    %33 = arith.mulf %32, %32 : vector<4x8x15xf32>
    %cst_22 = arith.constant 1.000000e-18 : f32
    %34 = vector.broadcast %cst_22 : f32 to vector<4x8x15xf32>
    %35 = arith.addf %33, %34 : vector<4x8x15xf32>
    %36 = math.rsqrt %35 : vector<4x8x15xf32>
    %37 = math.rsqrt %36 : vector<4x8x15xf32>
    %38 = arith.addf %29, %37 : vector<4x8x15xf32>
    %c0_23 = arith.constant 0 : index
    %c0_24 = arith.constant 0 : index
    %c0_25 = arith.constant 0 : index
    %39 = vector.load %arg5[%c0_23, %c0_24, %c0_25] : memref<4x8x16xf32, #tpu.memory_space<vmem>>, vector<4x8x15xf32>
    tpu.vector_store %arg5[%c0_23, %c0_24, %c0_25], %38 {strides = array<i32>} : memref<4x8x16xf32, #tpu.memory_space<vmem>>, vector<4x8x15xf32>,
    %c0_26 = arith.constant 0 : index
    %c0_27 = arith.constant 0 : index
    %c15 = arith.constant 15 : index
    %40 = vector.load %arg5[%c0_26, %c0_27, %c15] : memref<4x8x16xf32, #tpu.memory_space<vmem>>, vector<4x8x1xf32>
    %41 = vector.extract_strided_slice %3 {offsets = [0, 0, 15], sizes = [4, 8, 1], strides = [1, 1, 1]} : vector<4x8x16xf32> to vector<4x8x1xf32>
    %42 = arith.mulf %41, %41 : vector<4x8x1xf32>
    %cst_28 = arith.constant 1.000000e-18 : f32
    %43 = vector.broadcast %cst_28 : f32 to vector<4x8x1xf32>
    %44 = arith.addf %42, %43 : vector<4x8x1xf32>
    %45 = math.rsqrt %44 : vector<4x8x1xf32>
    %46 = math.rsqrt %45 : vector<4x8x1xf32>
    %47 = arith.addf %40, %46 : vector<4x8x1xf32>
    %c0_29 = arith.constant 0 : index
    %c0_30 = arith.constant 0 : index
    %c15_31 = arith.constant 15 : index
    %48 = vector.load %arg5[%c0_29, %c0_30, %c15_31] : memref<4x8x16xf32, #tpu.memory_space<vmem>>, vector<4x8x1xf32>
    tpu.vector_store %arg5[%c0_29, %c0_30, %c15_31], %47 {strides = array<i32>} : memref<4x8x16xf32, #tpu.memory_space<vmem>>, vector<4x8x1xf32>,
    %c1_i32_32 = arith.constant 1 : i32
    %49 = arith.cmpi eq, %arg1, %c1_i32_32 : i32
    %50 = arith.extui %49 : i1 to i32
    %c0_i32_33 = arith.constant 0 : i32
    %51 = arith.cmpi ne, %50, %c0_i32_33 : i32
    scf.if %51 {
      %c0_34 = arith.constant 0 : index
      %c0_35 = arith.constant 0 : index
      %c0_36 = arith.constant 0 : index
      %52 = vector.load %arg5[%c0_34, %c0_35, %c0_36] : memref<4x8x16xf32, #tpu.memory_space<vmem>>, vector<4x8x16xf32>
      %53 = vector.shape_cast %52 : vector<4x8x16xf32> to vector<1x4x8x16xf32>
      %cst_37 = arith.constant dense<0.000000e+00> : vector<1xf32>
      %54 = vector.multi_reduction <add>, %53, %cst_37 [1, 2, 3] : vector<1x4x8x16xf32> to vector<1xf32>
      %55 = vector.shape_cast %54 : vector<1xf32> to vector<1x1x1x1xf32>
      %56 = vector.extract %55[0, 0, 0, 0] : f32 from vector<1x1x1x1xf32>
      %57 = vector.broadcast %56 : f32 to vector<1x1x1xf32>
      %c0_38 = arith.constant 0 : index
      %c0_39 = arith.constant 0 : index
      %c0_40 = arith.constant 0 : index
      %58 = vector.load %arg4[%c0_38, %c0_39, %c0_40] : memref<1x1x1xf32, #tpu.memory_space<vmem>>, vector<1x1x1xf32>
      tpu.vector_store %arg4[%c0_38, %c0_39, %c0_40], %57 {strides = array<i32>} : memref<1x1x1xf32, #tpu.memory_space<vmem>>, vector<1x1x1xf32>,
    } else {
    }
    return
  }
  func.func @transform_0(%arg0: i32, %arg1: i32) -> (i32, i32, i32) {
    %c0_i32 = arith.constant 0 : i32
    %c0_i32_0 = arith.constant 0 : i32
    return %arg0, %arg1, %c0_i32 : i32, i32, i32
  }
  func.func @transform_1(%arg0: i32, %arg1: i32) -> (i32, i32, i32) {
    %c1_i32 = arith.constant 1 : i32
    %0 = arith.addi %arg1, %c1_i32 : i32
    %c1_i32_0 = arith.constant 1 : i32
    %1 = arith.muli %0, %c1_i32_0 : i32
    %c1_i32_1 = arith.constant 1 : i32
    %2 = arith.minsi %1, %c1_i32_1 : i32
    %c0_i32 = arith.constant 0 : i32
    %c0_i32_2 = arith.constant 0 : i32
    return %arg0, %2, %c0_i32 : i32, i32, i32
  }
  func.func @transform_2(%arg0: i32, %arg1: i32) -> (i32, i32, i32) {
    %c0_i32 = arith.constant 0 : i32
    %c0_i32_0 = arith.constant 0 : i32
    %c0_i32_1 = arith.constant 0 : i32
    return %arg0, %c0_i32, %c0_i32_0 : i32, i32, i32
  }
}

</mosaic_0001>

<llo_original>
// kernel: tpu_custom_call.1
$region0: #{tpu_custom_call.1}
  #allocation0 [shape = 'u32[]', space=smem, size = 0x4, offset = 0x4, fixed_abs, tag = 'smem constant byte address 0x4 - core index']
  #allocation1 [shape = 'u32[144,128]{1,0:T(1,128)}', space=vmem, size = 0x12000, scoped, tag = 'internal scratch']
  #allocation2 [shape = 'f32[4,8,16]{2,1,0:T(8,128)}', space=vmem, size = 0x4000, scoped, tag = 'scratch operand']
  %s0 = inlined_call_operand.hbm [shape: f32[8,16,16], index: 0, kind: input, shape index: {}]
  %s1 = inlined_call_operand.hbm [shape: f32[8,16,16], index: 1, kind: input, shape index: {}]
  %s2 = inlined_call_operand.vmem [shape: f32[2,1,1], index: 2, kind: output, shape index: {}]
  %s3 = sld [smem:[#allocation0]]
  $region57: #{tpu_custom_call.1} parent=0
    _
  %s5 = ssub.s32 1, %s3
  %s6 = scalar_select 0, %s5, %s3
  $region1: #{tpu_custom_call.1} parent=0
    #allocation3 [shape = 'u8[32768]{0}', space=vmem, size = 0x8000, scoped, tag = 'input window, operand 0']
    #allocation4 [shape = 's32[2]{0}', space=sflag, size = 0x8, scoped, tag = 'scoped memory for tpu_custom_call.1']
    #allocation5 [shape = 'u8[32768]{0}', space=vmem, size = 0x8000, scoped, tag = 'input window, operand 1']
    #allocation6 [shape = 's32[2]{0}', space=sflag, size = 0x8, scoped, tag = 'scoped memory for tpu_custom_call.1']
    %7 = vsyncpa [#allocation4], 0
    %s8 = scalar_lea.sflag [#allocation4], 1
    %9 = vsyncpa %s8, 0
    %10 = vsyncpa [#allocation6], 0
    %s11 = scalar_lea.sflag [#allocation6], 1
    %12 = vsyncpa %s11, 0
    loop: start=0, step=1, limit=6
    $region2: #{tpu_custom_call.1} parent=1 // loop_pre_header
      _
    $region3: #{tpu_custom_call.1} parent=1 // loop_header
      %s14 = sphi 0, %s18
      %p15 = scmp.ge.s32.totalorder %s14, 6
      %s21 = sphi 0, %s33
      %s22 = sphi 0, %s29
      %s23 = sphi 0, %s21
      %s24 = sphi 0, %s22
      %s25 = sphi 0, %s23
      %s26 = sphi 0, %s24
      %s38 = sphi 0, %s40
      %s41 = sphi 0, %s38
      %s42 = sphi 0, %s41
      %s58 = sphi 0, %s42
      %s72 = sphi 0, %s74
      %s75 = sphi 0, %s72
      %s76 = sphi 0, %s75
      %s92 = sphi 0, %s76
      %s98 = sphi 0, %s100
      %s101 = sphi 0, %s98
      %s102 = sphi 0, %s101
      %s118 = sphi 0, %s102
    $region4: #{tpu_custom_call.1} parent=1 // loop_header_branch
      %17 = sbr.rel (%p15) target = $region8
    $region5: #{tpu_custom_call.1} parent=1 // loop_body
      %s19 = ssub.s32 %s14, 1
      %s20 = ssub.s32 %s14, 2
      %s27 = sadd.s32 1, %s22
      %p28 = scmp.ge.s32.totalorder %s27, 2
      %s29 = scalar_select %p28, 0, %s27
      %s30 = sadd.s32 1, %s21
      %s31 = scalar_select %p28, %s30, %s21
      %p32 = scmp.ge.s32.totalorder %s31, 2
      %s33 = scalar_select %p32, 0, %s31
      %s34 = ssub.s32 %s21, %s33
      %s35 = ssub.s32 %s22, %s29
      %s36 = sor.u32 %s34, %s35
      %p37 = scmp.eq.s32.totalorder %s36, 0
      %s39 = sadd.s32 %s38, 1
      %s40 = scalar_select %p37, %s38, %s39
      %p43 = pneg %p37
      %p44 = scmp.eq.s32.totalorder %s14, 3
      %p45 = por %p43, %p44
      %p46 = scmp.ne.s32.totalorder %s38, %s41
      %p47 = scmp.eq.s32.totalorder %s14, 0
      %p48 = por %p46, %p47
      %p49 = scmp.ne.s32.totalorder %s38, %s41
      %p50 = scmp.eq.s32.totalorder %s19, 3
      %p51 = por %p49, %p50
      %p52 = scmp.ne.s32.totalorder %s41, %s42
      %p53 = scmp.eq.s32.totalorder %s19, 0
      %p54 = por %p52, %p53
      %p55 = scmp.ne.s32.totalorder %s41, %s42
      %p56 = scmp.eq.s32.totalorder %s20, 3
      %p57 = por %p55, %p56
      %p59 = scmp.ne.s32.totalorder %s42, %s58
      %p60 = scmp.eq.s32.totalorder %s20, 0
      %p61 = por %p59, %p60
      %s62 = sadd.s32 %s22, 1
      %p63 = scmp.lt.s32.totalorder %s62, 1
      %s64 = scalar_select %p63, %s62, 1
      %s65 = sadd.s32 %s29, 1
      %p66 = scmp.lt.s32.totalorder %s65, 1
      %s67 = scalar_select %p66, %s65, 1
      %s68 = ssub.s32 %s21, %s33
      %s69 = ssub.s32 %s64, %s67
      %s70 = sor.u32 %s68, %s69
      %p71 = scmp.eq.s32.totalorder %s70, 0
      %s73 = sadd.s32 %s72, 1
      %s74 = scalar_select %p71, %s72, %s73
      %p77 = pneg %p71
      %p78 = scmp.eq.s32.totalorder %s14, 3
      %p79 = por %p77, %p78
      %p80 = scmp.ne.s32.totalorder %s72, %s75
      %p81 = scmp.eq.s32.totalorder %s14, 0
      %p82 = por %p80, %p81
      %p83 = scmp.ne.s32.totalorder %s72, %s75
      %p84 = scmp.eq.s32.totalorder %s19, 3
      %p85 = por %p83, %p84
      %p86 = scmp.ne.s32.totalorder %s75, %s76
      %p87 = scmp.eq.s32.totalorder %s19, 0
      %p88 = por %p86, %p87
      %p89 = scmp.ne.s32.totalorder %s75, %s76
      %p90 = scmp.eq.s32.totalorder %s20, 3
      %p91 = por %p89, %p90
      %p93 = scmp.ne.s32.totalorder %s76, %s92
      %p94 = scmp.eq.s32.totalorder %s20, 0
      %p95 = por %p93, %p94
      %s96 = ssub.s32 %s21, %s33
      %p97 = scmp.eq.s32.totalorder %s96, 0
      %s99 = sadd.s32 %s98, 1
      %s100 = scalar_select %p97, %s98, %s99
      %p103 = pneg %p97
      %p104 = scmp.eq.s32.totalorder %s14, 3
      %p105 = por %p103, %p104
      %p106 = scmp.ne.s32.totalorder %s98, %s101
      %p107 = scmp.eq.s32.totalorder %s14, 0
      %p108 = por %p106, %p107
      %p109 = scmp.ne.s32.totalorder %s98, %s101
      %p110 = scmp.eq.s32.totalorder %s19, 3
      %p111 = por %p109, %p110
      %p112 = scmp.ne.s32.totalorder %s101, %s102
      %p113 = scmp.eq.s32.totalorder %s19, 0
      %p114 = por %p112, %p113
      %p115 = scmp.ne.s32.totalorder %s101, %s102
      %p116 = scmp.eq.s32.totalorder %s20, 3
      %p117 = por %p115, %p116
      %p119 = scmp.ne.s32.totalorder %s102, %s118
      %p120 = scmp.eq.s32.totalorder %s20, 0
      %p121 = por %p119, %p120
      %p122 = scmp.le.s32.totalorder 1, %s14
      %p123 = scmp.lt.s32.totalorder %s14, 5
      %p124 = pnand %p122, %p123
      %p125 = pneg %p124
      // Predicated region
      $region9: #{tpu_custom_call.1} parent=5 // pred_check
        _
      $region10: #{tpu_custom_call.1} parent=5 // pred_check_branch
        %127 = sbr.rel (%p124) target = $region12
      $region11: #{tpu_custom_call.1} parent=5 // pred_region
        %s128 = ssub.s32 %s14, 1
      $region12: #{tpu_custom_call.1} parent=5 // pred_fallthru
        _
      %p129 = scmp.lt.s32.totalorder %s14, 4
      // Predicated region
      $region13: #{tpu_custom_call.1} parent=5 // pred_check
        %p130 = pneg %p129
      $region14: #{tpu_custom_call.1} parent=5 // pred_check_branch
        %132 = sbr.rel (%p130) target = $region16
      $region15: #{tpu_custom_call.1} parent=5 // pred_region
        // Predicated region
        $region17: #{tpu_custom_call.1} parent=15 // pred_check
          %p133 = pneg %p48
        $region18: #{tpu_custom_call.1} parent=15 // pred_check_branch
          %135 = sbr.rel (%p133) target = $region20
        $region19: #{tpu_custom_call.1} parent=15 // pred_region
          %s136 = sand.u32 %s38, 1
          %s137 = scalar_lea.sflag [#allocation4], %s136
          %s138 = sand.u32 %s38, 1
          %s139 = smul.addr %s138, 32
          %s140 = scalar_lea.vmem [#allocation3], %s139
          %s141 = smul.u32 4, %s21
          %s143 = ssub.s32 512, 512
          %144 = vsyncadd %s137, %s143
          %s145 = smul.addr %s141, 2
          %s146 = sadd.s32 %s22, %s145
          %s147 = smul.addr %s146, 128
          %s148 = scalar_lea.hbm %s0, %s147
          %s149 = sshll.u32 %s140, 4
          %s150 = int_to_ptr.vmem [resolvable:$true] %s149
          %155 = dma.hbm_to_vmem [thread:$0]  %s148, 512, %s150, %s137, 256, 128, 8
        $region20: #{tpu_custom_call.1} parent=15 // pred_fallthru
          _
        // Predicated region
        $region21: #{tpu_custom_call.1} parent=15 // pred_check
          %p156 = pneg %p82
        $region22: #{tpu_custom_call.1} parent=15 // pred_check_branch
          %158 = sbr.rel (%p156) target = $region24
        $region23: #{tpu_custom_call.1} parent=15 // pred_region
          %s159 = sand.u32 %s72, 1
          %s160 = scalar_lea.sflag [#allocation6], %s159
          %s161 = sand.u32 %s72, 1
          %s162 = smul.addr %s161, 32
          %s163 = scalar_lea.vmem [#allocation5], %s162
          %s164 = sadd.s32 %s22, 1
          %p165 = scmp.lt.s32.totalorder %s164, 1
          %s166 = scalar_select %p165, %s164, 1
          %s167 = smul.u32 4, %s21
          %s169 = ssub.s32 512, 512
          %170 = vsyncadd %s160, %s169
          %s171 = smul.addr %s167, 2
          %s172 = sadd.s32 %s166, %s171
          %s173 = smul.addr %s172, 128
          %s174 = scalar_lea.hbm %s1, %s173
          %s175 = sshll.u32 %s163, 4
          %s176 = int_to_ptr.vmem [resolvable:$true] %s175
          %181 = dma.hbm_to_vmem [thread:$0]  %s174, 512, %s176, %s160, 256, 128, 8
        $region24: #{tpu_custom_call.1} parent=15 // pred_fallthru
          _
      $region16: #{tpu_custom_call.1} parent=5 // pred_fallthru
        _
      %p182 = scmp.le.s32.totalorder 1, %s14
      %p183 = scmp.lt.s32.totalorder %s14, 5
      %p184 = pnand %p182, %p183
      %p185 = pneg %p184
      // Predicated region
      $region25: #{tpu_custom_call.1} parent=5 // pred_check
        _
      $region26: #{tpu_custom_call.1} parent=5 // pred_check_branch
        %187 = sbr.rel (%p184) target = $region28
      $region27: #{tpu_custom_call.1} parent=5 // pred_region
        %s188 = ssub.s32 %s14, 1
        %s189 = sand.u32 %s41, 1
        %s190 = scalar_lea.sflag [#allocation4], %s189
        %s191 = sand.u32 %s41, 1
        %s192 = smul.addr %s191, 32
        %s193 = scalar_lea.vmem [#allocation3], %s192
        // Predicated region
        $region29: #{tpu_custom_call.1} parent=27 // pred_check
          %p194 = pneg %p54
        $region30: #{tpu_custom_call.1} parent=27 // pred_check_branch
          %196 = sbr.rel (%p194) target = $region32
        $region31: #{tpu_custom_call.1} parent=27 // pred_region
          %197 = dma.done %s190, 512
        $region32: #{tpu_custom_call.1} parent=27 // pred_fallthru
          _
        %s198 = sand.u32 %s75, 1
        %s199 = scalar_lea.sflag [#allocation6], %s198
        %s200 = sand.u32 %s75, 1
        %s201 = smul.addr %s200, 32
        %s202 = scalar_lea.vmem [#allocation5], %s201
        // Predicated region
        $region33: #{tpu_custom_call.1} parent=27 // pred_check
          %p203 = pneg %p88
        $region34: #{tpu_custom_call.1} parent=27 // pred_check_branch
          %205 = sbr.rel (%p203) target = $region36
        $region35: #{tpu_custom_call.1} parent=27 // pred_region
          %206 = dma.done %s199, 512
        $region36: #{tpu_custom_call.1} parent=27 // pred_fallthru
          _
        %s207 = sand.u32 %s41, 1
        %s208 = scalar_lea.sflag [#allocation4], %s207
        %s209 = sand.u32 %s41, 1
        %s210 = smul.addr %s209, 32
        %s211 = scalar_lea.vmem [#allocation3], %s210
        %p212 = pneg %p54
        %p213 = pneg %p51
        %s214 = sand.u32 %s75, 1
        %s215 = scalar_lea.sflag [#allocation6], %s214
        %s216 = sand.u32 %s75, 1
        %s217 = smul.addr %s216, 32
        %s218 = scalar_lea.vmem [#allocation5], %s217
        %p219 = pneg %p88
        %p220 = pneg %p85
        %p221 = pneg %p114
        %p222 = pneg %p111
        %p223 = scmp.lt.s32.totalorder %s23, 1
        %s224 = scalar_select %p223, %s23, 1
        %s225 = scalar_lea.vmem %s2, %s224
        %s226 = smul.u32 4, %s23
        %s227 = sadd.s32 %s24, 1
        %p228 = scmp.lt.s32.totalorder %s227, 1
        %s229 = scalar_select %p228, %s227, 1
        %s230 = smul.u32 4, %s23
        %p231 = scmp.lt.s32.totalorder %s23, 1
        %s232 = scalar_select %p231, %s23, 1
        %s233 = scalar_lea.vmem %s2, %s232
        %p234 = scmp.eq.s32.totalorder %s24, 0
        // Predicated region
        $region37: #{tpu_custom_call.1} parent=27 // pred_check
          %p235 = pneg %p234
        $region38: #{tpu_custom_call.1} parent=27 // pred_check_branch
          %237 = sbr.rel (%p235) target = $region40
        $region39: #{tpu_custom_call.1} parent=27 // pred_region
          %vm238 = vcmask 130048
          %239 = vst.msk [vmem:[#allocation2] sm:$0xff] %vm238, 0.0
          %240 = vst.msk [vmem:[#allocation2 + $0x8] sm:$0xff] %vm238, 0.0
          %241 = vst.msk [vmem:[#allocation2 + $0x10] sm:$0xff] %vm238, 0.0
          %242 = vst.msk [vmem:[#allocation2 + $0x18] sm:$0xff] %vm238, 0.0
        $region40: #{tpu_custom_call.1} parent=27 // pred_fallthru
          _
        %v243 = vld [vmem:[%s193] sm:$0xff]
        %v244 = vld [vmem:[%s193 + $0x8] sm:$0xff]
        %v245 = vld [vmem:[%s193 + $0x10] sm:$0xff]
        %v246 = vld [vmem:[%s193 + $0x18] sm:$0xff]
        %v247 = vld [vmem:[%s202] sm:$0x1]
        %v248 = vld [vmem:[%s202 + $0x8] sm:$0x1]
        %v249 = vld [vmem:[%s202 + $0x10] sm:$0x1]
        %v250 = vld [vmem:[%s202 + $0x18] sm:$0x1]
        %p251 = scmp.eq.s32.totalorder %s24, 1
        %s252 = scalar_select %p251, 1, 0
        %v253 = vstv %s252
        %vm254 = vcmp.eq.s32.totalorder %v253, 1
        %v255 = vsel %vm254, 0.0, %v247
        %v256 = vsel %vm254, 0.0, %v248
        %v257 = vsel %vm254, 0.0, %v249
        %v258 = vsel %vm254, 0.0, %v250
        %v259 = vld [vmem:[#allocation2] sm:$0x7f]
        %v260 = vld [vmem:[#allocation2 + $0x8] sm:$0x7f]
        %v261 = vld [vmem:[#allocation2 + $0x10] sm:$0x7f]
        %v262 = vld [vmem:[#allocation2 + $0x18] sm:$0x7f]
        %v267 = vrot.slane %v243, 1
        %v268 = vrot.slane %v244, 1
        %v269 = vrot.slane %v245, 1
        %v270 = vrot.slane %v246, 1
        %v275 = vsub.f32 %v243, %v267
        %v276 = vsub.f32 %v244, %v268
        %v277 = vsub.f32 %v245, %v269
        %v278 = vsub.f32 %v246, %v270
        %v279 = vmul.f32 %v275, %v275
        %v280 = vmul.f32 %v276, %v276
        %v281 = vmul.f32 %v277, %v277
        %v282 = vmul.f32 %v278, %v278
        %v283 = vadd.f32 %v279, 1e-18
        %v284 = vadd.f32 %v280, 1e-18
        %v285 = vadd.f32 %v281, 1e-18
        %v286 = vadd.f32 %v282, 1e-18
        %v287 = vrsqrt.pop %v283
        %v288 = vrsqrt.pop %v284
        %v289 = vrsqrt.pop %v285
        %v290 = vrsqrt.pop %v286
        %v291 = vrsqrt.pop %v287
        %v292 = vrsqrt.pop %v288
        %v293 = vrsqrt.pop %v289
        %v294 = vrsqrt.pop %v290
        %v295 = vadd.f32 %v259, %v291
        %v296 = vadd.f32 %v260, %v292
        %v297 = vadd.f32 %v261, %v293
        %v298 = vadd.f32 %v262, %v294
        %vm299 = vcmask 129024
        %300 = vst.msk [vmem:[#allocation2] sm:$0x7f] %vm299, %v295
        %301 = vst.msk [vmem:[#allocation2 + $0x8] sm:$0x7f] %vm299, %v296
        %302 = vst.msk [vmem:[#allocation2 + $0x10] sm:$0x7f] %vm299, %v297
        %303 = vst.msk [vmem:[#allocation2 + $0x18] sm:$0x7f] %vm299, %v298
        %v304 = vld [vmem:[#allocation2 + $0x7] sm:$0x1]
        %v305 = vld [vmem:[#allocation2 + $0xf] sm:$0x1]
        %v306 = vld [vmem:[#allocation2 + $0x17] sm:$0x1]
        %v307 = vld [vmem:[#allocation2 + $0x1f] sm:$0x1]
        %v312 = vrot.slane %v255, 1
        %v313 = vrot.slane %v256, 1
        %v314 = vrot.slane %v257, 1
        %v315 = vrot.slane %v258, 1
        %v320 = vsub.f32 %v243, %v312
        %v321 = vsub.f32 %v244, %v313
        %v322 = vsub.f32 %v245, %v314
        %v323 = vsub.f32 %v246, %v315
        %v324 = vmul.f32 %v320, %v320
        %v325 = vmul.f32 %v321, %v321
        %v326 = vmul.f32 %v322, %v322
        %v327 = vmul.f32 %v323, %v323
        %v328 = vadd.f32 %v324, 1e-18
        %v329 = vadd.f32 %v325, 1e-18
        %v330 = vadd.f32 %v326, 1e-18
        %v331 = vadd.f32 %v327, 1e-18
        %v332 = vrsqrt.pop %v328
        %v333 = vrsqrt.pop %v329
        %v334 = vrsqrt.pop %v330
        %v335 = vrsqrt.pop %v331
        %v336 = vrsqrt.pop %v332
        %v337 = vrsqrt.pop %v333
        %v338 = vrsqrt.pop %v334
        %v339 = vrsqrt.pop %v335
        %v344 = vrot.slane %v336, 7
        %v345 = vrot.slane %v337, 7
        %v346 = vrot.slane %v338, 7
        %v347 = vrot.slane %v339, 7
        %v352 = vadd.f32 %v304, %v344
        %v353 = vadd.f32 %v305, %v345
        %v354 = vadd.f32 %v306, %v346
        %v355 = vadd.f32 %v307, %v347
        %vm356 = vcmask 122880
        %357 = vst.msk [vmem:[#allocation2 + $0x7] sm:$0x1] %vm356, %v352
        %358 = vst.msk [vmem:[#allocation2 + $0xf] sm:$0x1] %vm356, %v353
        %359 = vst.msk [vmem:[#allocation2 + $0x17] sm:$0x1] %vm356, %v354
        %360 = vst.msk [vmem:[#allocation2 + $0x1f] sm:$0x1] %vm356, %v355
        %v361 = vld [vmem:[#allocation2] sm:$0xff]
        %v362 = vld [vmem:[#allocation2 + $0x8] sm:$0xff]
        %v363 = vld [vmem:[#allocation2 + $0x10] sm:$0xff]
        %v364 = vld [vmem:[#allocation2 + $0x18] sm:$0xff]
        %365 = vrot.lane.b32.xlu0 %v243, 127
        %v366 = vpop.permute.xlu0 %365
        %367 = vrot.lane.b32.xlu0 %v244, 127
        %v368 = vpop.permute.xlu0 %367
        %369 = vrot.lane.b32.xlu0 %v245, 127
        %v370 = vpop.permute.xlu0 %369
        %371 = vrot.lane.b32.xlu0 %v246, 127
        %v372 = vpop.permute.xlu0 %371
        %v377 = vsub.f32 %v243, %v366
        %v378 = vsub.f32 %v244, %v368
        %v379 = vsub.f32 %v245, %v370
        %v380 = vsub.f32 %v246, %v372
        %v381 = vmul.f32 %v377, %v377
        %v382 = vmul.f32 %v378, %v378
        %v383 = vmul.f32 %v379, %v379
        %v384 = vmul.f32 %v380, %v380
        %v385 = vadd.f32 %v381, 1e-18
        %v386 = vadd.f32 %v382, 1e-18
        %v387 = vadd.f32 %v383, 1e-18
        %v388 = vadd.f32 %v384, 1e-18
        %v389 = vrsqrt.pop %v385
        %v390 = vrsqrt.pop %v386
        %v391 = vrsqrt.pop %v387
        %v392 = vrsqrt.pop %v388
        %v393 = vrsqrt.pop %v389
        %v394 = vrsqrt.pop %v390
        %v395 = vrsqrt.pop %v391
        %v396 = vrsqrt.pop %v392
        %v397 = vadd.f32 %v361, %v393
        %v398 = vadd.f32 %v362, %v394
        %v399 = vadd.f32 %v363, %v395
        %v400 = vadd.f32 %v364, %v396
        %vm401 = vcmask 121856
        %402 = vst.msk [vmem:[#allocation2] sm:$0xff] %vm401, %v397
        %403 = vst.msk [vmem:[#allocation2 + $0x8] sm:$0xff] %vm401, %v398
        %404 = vst.msk [vmem:[#allocation2 + $0x10] sm:$0xff] %vm401, %v399
        %405 = vst.msk [vmem:[#allocation2 + $0x18] sm:$0xff] %vm401, %v400
        %v406 = vld [vmem:[#allocation2] sm:$0xff]
        %v407 = vld [vmem:[#allocation2 + $0x8] sm:$0xff]
        %v408 = vld [vmem:[#allocation2 + $0x10] sm:$0xff]
        %v409 = vld [vmem:[#allocation2 + $0x18] sm:$0xff]
        %v410 = vmul.f32 %v243, %v243
        %v411 = vmul.f32 %v244, %v244
        %v412 = vmul.f32 %v245, %v245
        %v413 = vmul.f32 %v246, %v246
        %v414 = vadd.f32 %v410, 1e-18
        %v415 = vadd.f32 %v411, 1e-18
        %v416 = vadd.f32 %v412, 1e-18
        %v417 = vadd.f32 %v413, 1e-18
        %v418 = vrsqrt.pop %v414
        %v419 = vrsqrt.pop %v415
        %v420 = vrsqrt.pop %v416
        %v421 = vrsqrt.pop %v417
        %v422 = vrsqrt.pop %v418
        %v423 = vrsqrt.pop %v419
        %v424 = vrsqrt.pop %v420
        %v425 = vrsqrt.pop %v421
        %v426 = vadd.f32 %v406, %v422
        %v427 = vadd.f32 %v407, %v423
        %v428 = vadd.f32 %v408, %v424
        %v429 = vadd.f32 %v409, %v425
        %vm430 = vcmask 130168
        %431 = vst.msk [vmem:[#allocation2] sm:$0xff] %vm430, %v426
        %432 = vst.msk [vmem:[#allocation2 + $0x8] sm:$0xff] %vm430, %v427
        %433 = vst.msk [vmem:[#allocation2 + $0x10] sm:$0xff] %vm430, %v428
        %434 = vst.msk [vmem:[#allocation2 + $0x18] sm:$0xff] %vm430, %v429
        // Predicated region
        $region41: #{tpu_custom_call.1} parent=27 // pred_check
          %p435 = pneg %p251
        $region42: #{tpu_custom_call.1} parent=27 // pred_check_branch
          %437 = sbr.rel (%p435) target = $region44
        $region43: #{tpu_custom_call.1} parent=27 // pred_region
          %v438 = vld [vmem:[#allocation2] sm:$0xff]
          %v439 = vld [vmem:[#allocation2 + $0x8] sm:$0xff]
          %v440 = vld [vmem:[#allocation2 + $0x10] sm:$0xff]
          %v441 = vld [vmem:[#allocation2 + $0x18] sm:$0xff]
          %vm442 = vcmask 130048
          %v443 = vsel %vm442, %v438, 0.0
          %v444 = vsel %vm442, %v439, 0.0
          %v445 = vadd.f32 %v443, %v444
          %v446 = vsel %vm442, %v440, 0.0
          %v447 = vadd.f32 %v445, %v446
          %v448 = vsel %vm442, %v441, 0.0
          %v449 = vadd.f32 %v447, %v448
          %450 = vadd.xlane.f32.xlu0 %v449
          %v451 = vpop.xlane.xlu0 %450
          %v452 = vrot.slane %v451, 4
          %v453 = vadd.f32 %v451, %v452
          %v454 = vrot.slane %v453, 2
          %v455 = vadd.f32 %v453, %v454
          %v456 = vrot.slane %v455, 1
          %v457 = vadd.f32 %v455, %v456
          %s458 = vtos %v457
          %v459 = vstv %s458
          %vm460 = vcmask 0
          %461 = vst.msk [vmem:[%s233] sm:$0x1] %vm460, %v459
        $region44: #{tpu_custom_call.1} parent=27 // pred_fallthru
          _
        %p462 = scmp.lt.s32.totalorder %s23, 1
        %s463 = scalar_select %p462, %s23, 1
        %s464 = scalar_lea.vmem %s2, %s463
        // Predicated region
        $region45: #{tpu_custom_call.1} parent=27 // pred_check
          %p465 = pneg %p111
        $region46: #{tpu_custom_call.1} parent=27 // pred_check_branch
          %467 = sbr.rel (%p465) target = $region48
        $region47: #{tpu_custom_call.1} parent=27 // pred_region
          _
        $region48: #{tpu_custom_call.1} parent=27 // pred_fallthru
          _
      $region28: #{tpu_custom_call.1} parent=5 // pred_fallthru
        _
      %p468 = scmp.le.s32.totalorder 2, %s14
      // Predicated region
      $region49: #{tpu_custom_call.1} parent=5 // pred_check
        %p469 = pneg %p468
      $region50: #{tpu_custom_call.1} parent=5 // pred_check_branch
        %471 = sbr.rel (%p469) target = $region52
      $region51: #{tpu_custom_call.1} parent=5 // pred_region
        %s472 = ssub.s32 %s14, 2
        // Predicated region
        $region53: #{tpu_custom_call.1} parent=51 // pred_check
          %p473 = pneg %p117
        $region54: #{tpu_custom_call.1} parent=51 // pred_check_branch
          %475 = sbr.rel (%p473) target = $region56
        $region55: #{tpu_custom_call.1} parent=51 // pred_region
          %p476 = scmp.lt.s32.totalorder %s25, 1
          %s477 = scalar_select %p476, %s25, 1
          %s478 = scalar_lea.vmem %s2, %s477
        $region56: #{tpu_custom_call.1} parent=51 // pred_fallthru
          _
      $region52: #{tpu_custom_call.1} parent=5 // pred_fallthru
        _
    $region6: #{tpu_custom_call.1} parent=1 // loop_footer
      %s18 = sadd.s32 1, %s14
    $region7: #{tpu_custom_call.1} parent=1 // loop_footer_branch
      %13 = sbr.rel target = $region3
    $region8: #{tpu_custom_call.1} parent=1 // loop_exit
      _
    %479 = vsyncpa [#allocation4], 1
    %s480 = scalar_lea.sflag [#allocation4], 1
    %481 = vsyncpa %s480, 1
    %482 = vsyncpa [#allocation6], 1
    %s483 = scalar_lea.sflag [#allocation6], 1
    %484 = vsyncpa %s483, 1

</llo_original>
